<compile_context>
chip_gen: v6e
topology: v6e:2x2x1
jax: 0.10.0
libtpu: 0.0.40
codegen_flags: <defaults>
</compile_context>

<pallas_src>
import jax
import jax.numpy as jnp
from jax.experimental import pallas as pl
from jax.experimental.pallas import tpu as pltpu


def _patch_merge_kernel(x_ref, o_ref):
    """x_ref: (T, G, Tw, G*D) indexed (slab, p, w, fused qd)
       o_ref: (T, Tw, G, G*D) indexed (slab, w, p, fused qd)"""
    # Major-axis-only permutation (lane-dense last dim untouched).
    o_ref[...] = jnp.swapaxes(x_ref[...], 1, 2)


def _padded_block_bytes(shape, itemsize):
    """VMEM footprint of a block including (sublane, lane) padding."""
    sublane = {4: 8, 2: 16, 1: 32}.get(itemsize, 8)
    *lead, s, l = shape
    s_pad = -(-s // sublane) * sublane
    l_pad = -(-l // 128) * 128
    n = 1
    for d in lead:
        n *= d
    return n * s_pad * l_pad * itemsize


def my_patch_merging_forward(x, out_patch_num, *, vmem_block_budget_bytes=None):
    """x: (B, L, D), L = patch_size**2. Returns (B, out_patch_num, grid**2 * D)."""
    B, L, D = x.shape
    patch_size = int(round(L ** 0.5))
    assert patch_size * patch_size == L, "input feature has wrong size"
    O = int(round(out_patch_num ** 0.5))
    assert O * O == out_patch_num
    G = patch_size // O
    assert G * O == patch_size

    GD = G * D
    n_slabs = B * O
    itemsize = jnp.dtype(x.dtype).itemsize
    sublane = {4: 8, 2: 16, 1: 32}.get(itemsize, 8)

    # ---- per-generation VMEM capacity and per-step block budget ----
    try:
        vmem_cap = int(pltpu.get_tpu_info().vmem_capacity_bytes)
    except Exception:
        vmem_cap = 64 << 20  # conservative fallback (v7x per-TC VMEM)
    if vmem_block_budget_bytes is None:
        # ~16 MiB/block (in+out, padded) on v5e/v6e, ~8 MiB on v7x; with
        # double-buffering that uses at most ~vmem_cap/4.
        vmem_block_budget_bytes = min(vmem_cap // 8, 16 << 20)

    # Free contiguous view: (b*O + h, p, w, q*D + d) -- minor (q, d) folded.
    xv = x.reshape(n_slabs, G, O, GD)

    # ---- tile chooser ----
    slab_in_padded = _padded_block_bytes((G, O, GD), itemsize)
    slab_out_padded = _padded_block_bytes((O, G, GD), itemsize)
    slab_padded = slab_in_padded + slab_out_padded      # in + out, per slab
    slab_real = 2 * G * O * GD * itemsize                # in + out real bytes

    min_steps = 8          # >= ~4 pipelined steps per TensorCore on v7x
    min_real = 2 << 20     # keep >= ~1 MiB real payload each way per step

    if slab_padded <= vmem_block_budget_bytes:
        # Tile only the leading slab axis; whole O fits in one block.
        t_cap = max(1, min(n_slabs, vmem_block_budget_bytes // slab_padded))
        t = max(1, n_slabs // min_steps)              # enough steps to pipeline
        t = max(t, -(-min_real // slab_real))         # ...but keep blocks fat
        t = min(t, t_cap, n_slabs)
        t_w = O
    else:
        # Slab-splitting fallback: one slab alone blows the budget (big G^2*D,
        # v7x 64 MiB) -> also tile the w (O) axis.  t_w must be a multiple of
        # the sublane quantum (or the full O) to satisfy the (8, 128) rule.
        t = 1
        t_w = O if O < sublane else sublane
        for m in range(O // sublane, 0, -1):
            cand = m * sublane
            cand_bytes = (_padded_block_bytes((1, G, cand, GD), itemsize)
                          + _padded_block_bytes((1, cand, G, GD), itemsize))
            if cand_bytes <= vmem_block_budget_bytes:
                t_w = cand
                break

    in_block = (t, G, t_w, GD)
    out_block = (t, t_w, G, GD)

    # Double-buffered in + out blocks; limit always set explicitly (v5e's
    # default scoped limit is only 16 MiB) and clamped to chip capacity.
    vmem_needed = 2 * (_padded_block_bytes(in_block, itemsize)
                       + _padded_block_bytes(out_block, itemsize))
    vmem_limit = int(min(vmem_cap, max(vmem_needed + (4 << 20), 16 << 20)))

    grid = (pl.cdiv(n_slabs, t), pl.cdiv(O, t_w))

    out = pl.pallas_call(
        _patch_merge_kernel,
        out_shape=jax.ShapeDtypeStruct((n_slabs, O, G, GD), x.dtype),
        grid_spec=pltpu.PrefetchScalarGridSpec(
            num_scalar_prefetch=0,
            grid=grid,
            in_specs=[pl.BlockSpec(in_block, lambda i, j: (i, 0, j, 0))],
            out_specs=pl.BlockSpec(out_block, lambda i, j: (i, j, 0, 0)),
        ),
        compiler_params=pltpu.CompilerParams(
            dimension_semantics=("parallel", "parallel"),
            vmem_limit_bytes=vmem_limit,
        ),
    )(xv)

    # Free contiguous reshape to the module's output layout.
    return out.reshape(B, O * O, G * G * D)


def _reference(x, out_patch_num):
    """Pure-JAX transcription of MyPatchMerging.forward."""
    B, L, D = x.shape
    P = int(round(L ** 0.5))
    O = int(round(out_patch_num ** 0.5))
    G = P // O
    xr = x.reshape(B, O, G, O, G, D)
    xr = jnp.transpose(xr, (0, 1, 3, 2, 4, 5))   # 'bhpwqd->bhwpqd'
    return xr.reshape(B, O * O, G * G * D)


if __name__ == "__main__":
    key = jax.random.PRNGKey(0)

    # Test 1: B=2, L=256 tokens (16x16), D=32, out_patch_num=16
    #         -> O=4, G=4, output (2, 16, 512); G*D = 128 (lane-dense).
    B, patch_size, D, out_patch_num = 2, 16, 32, 16
    L = patch_size * patch_size
    x = jax.random.normal(key, (B, L, D), dtype=jnp.float32)
    y = jax.block_until_ready(my_patch_merging_forward(x, out_patch_num))
    y_ref = _reference(x, out_patch_num)
    G = patch_size // int(round(out_patch_num ** 0.5))
    assert y.shape == (B, out_patch_num, G * G * D), y.shape
    assert jnp.array_equal(y, y_ref)

    # Test 2: non-power-of-two shape + tiny budget to exercise the cdiv
    #         (partial last block) path: B=3, P=12, D=48, out_patch_num=9.
    B2, P2, D2, opn2 = 3, 12, 48, 9
    x2 = jax.random.normal(jax.random.PRNGKey(1), (B2, P2 * P2, D2),
                           dtype=jnp.float32)
    y2 = jax.block_until_ready(
        my_patch_merging_forward(x2, opn2, vmem_block_budget_bytes=256 << 10))
    y2_ref = _reference(x2, opn2)
    assert y2.shape == y2_ref.shape, y2.shape
    assert jnp.array_equal(y2, y2_ref)

    print("KERNEL_OK")
</pallas_src>

<mosaic_0001>
module attributes {stable_mosaic.version = 11 : i64} {
  func.func @_patch_merge_kernel(%arg0: i32, %arg1: i32, %arg2: memref<8x4x4x128xf32, #tpu.memory_space<vmem>>, %arg3: memref<8x4x4x128xf32, #tpu.memory_space<vmem>>) attributes {dimension_semantics = [#tpu.dimension_semantics<parallel>, #tpu.dimension_semantics<parallel>], iteration_bounds = array<i64: 1, 1>, scalar_prefetch = 0 : i64, scratch_operands = 0 : i64, tpu.core_type = #tpu.core_type<tc>, window_params = [{transform_indices = @transform_0, window_bounds = array<i64: 8, 4, 4, 128>}, {transform_indices = @transform_1, window_bounds = array<i64: 8, 4, 4, 128>}]} {
    %c0 = arith.constant 0 : index
    %c0_0 = arith.constant 0 : index
    %c0_1 = arith.constant 0 : index
    %c0_2 = arith.constant 0 : index
    %0 = vector.load %arg2[%c0, %c0_0, %c0_1, %c0_2] : memref<8x4x4x128xf32, #tpu.memory_space<vmem>>, vector<8x4x4x128xf32>
    %1 = tpu.transpose %0, [0, 2, 1, 3] : vector<8x4x4x128xf32> -> vector<8x4x4x128xf32>
    %c0_3 = arith.constant 0 : index
    %c0_4 = arith.constant 0 : index
    %c0_5 = arith.constant 0 : index
    %c0_6 = arith.constant 0 : index
    %2 = vector.load %arg3[%c0_3, %c0_4, %c0_5, %c0_6] : memref<8x4x4x128xf32, #tpu.memory_space<vmem>>, vector<8x4x4x128xf32>
    tpu.vector_store %arg3[%c0_3, %c0_4, %c0_5, %c0_6], %1 {strides = array<i32>} : memref<8x4x4x128xf32, #tpu.memory_space<vmem>>, vector<8x4x4x128xf32>,
    return
  }
  func.func @transform_0(%arg0: i32, %arg1: i32) -> (i32, i32, i32, i32) {
    %c0_i32 = arith.constant 0 : i32
    %c0_i32_0 = arith.constant 0 : i32
    %c0_i32_1 = arith.constant 0 : i32
    return %arg0, %c0_i32, %arg1, %c0_i32_0 : i32, i32, i32, i32
  }
  func.func @transform_1(%arg0: i32, %arg1: i32) -> (i32, i32, i32, i32) {
    %c0_i32 = arith.constant 0 : i32
    %c0_i32_0 = arith.constant 0 : i32
    %c0_i32_1 = arith.constant 0 : i32
    return %arg0, %arg1, %c0_i32, %c0_i32_0 : i32, i32, i32, i32
  }
}

</mosaic_0001>

<llo_original>
// kernel: tpu_custom_call.1
$region0: #{tpu_custom_call.1}
  #allocation0 [shape = 'u32[]', space=smem, size = 0x4, offset = 0x4, fixed_abs, tag = 'smem constant byte address 0x4 - core index']
  #allocation1 [shape = 'u32[144,128]{1,0:T(1,128)}', space=vmem, size = 0x12000, scoped, tag = 'internal scratch']
  %s0 = inlined_call_operand.hbm [shape: f32[8,4,4,128], index: 0, kind: input, shape index: {}]
  %s1 = inlined_call_operand.hbm [shape: f32[8,4,4,128], index: 1, kind: output, shape index: {}]
  %s2 = sld [smem:[#allocation0]]
  $region18: #{tpu_custom_call.1} parent=0
    _
  %s4 = ssub.s32 1, %s2
  %s5 = scalar_select 0, %s4, %s2
  $region1: #{tpu_custom_call.1} parent=0
    #allocation2 [shape = 'u8[65536]{0}', space=vmem, size = 0x10000, scoped, tag = 'input window, operand 0, single buffered']
    #allocation3 [shape = 's32[1]{0}', space=sflag, size = 0x4, scoped, tag = 'scoped memory for tpu_custom_call.1']
    #allocation4 [shape = 's32[1]{0}', space=sflag, size = 0x4, scoped, tag = 'scoped memory for tpu_custom_call.1']
    #allocation5 [shape = 'u8[65536]{0}', space=vmem, size = 0x10000, scoped, tag = 'output window, operand 0, single buffered']
    %6 = vsyncpa [#allocation3], 0
    %7 = vsyncpa [#allocation4], 0
    // Predicated region
    $region2: #{tpu_custom_call.1} parent=1 // pred_check
      _
    $region3: #{tpu_custom_call.1} parent=1 // pred_check_branch
      %9 = sbr.rel (0) target = $region5
    $region4: #{tpu_custom_call.1} parent=1 // pred_region
      %s11 = ssub.s32 2048, 2048
      %12 = vsyncadd [#allocation3], %s11
      %s13 = sshll.u32 [#allocation2], 4
      %s14 = int_to_ptr.vmem [resolvable:$true] %s13
      %19 = dma.hbm_to_vmem [thread:$0]  %s0, 2048, %s14, [#allocation3], 64, 64, 4
    $region5: #{tpu_custom_call.1} parent=1 // pred_fallthru
      _
    // Predicated region
    $region6: #{tpu_custom_call.1} parent=1 // pred_check
      _
    $region7: #{tpu_custom_call.1} parent=1 // pred_check_branch
      %21 = sbr.rel (0) target = $region9
    $region8: #{tpu_custom_call.1} parent=1 // pred_region
      %22 = dma.done [#allocation3], 2048
    $region9: #{tpu_custom_call.1} parent=1 // pred_fallthru
      _
    %v23 = vld [vmem:[#allocation2] sm:$0xf]
    %v24 = vld [vmem:[#allocation2 + $0x4] sm:$0xf]
    %v25 = vld [vmem:[#allocation2 + $0x8] sm:$0xf]
    %v26 = vld [vmem:[#allocation2 + $0xc] sm:$0xf]
    %v27 = vld [vmem:[#allocation2 + $0x10] sm:$0xf]
    %v28 = vld [vmem:[#allocation2 + $0x14] sm:$0xf]
    %v29 = vld [vmem:[#allocation2 + $0x18] sm:$0xf]
    %v30 = vld [vmem:[#allocation2 + $0x1c] sm:$0xf]
    %v31 = vld [vmem:[#allocation2 + $0x20] sm:$0xf]
    %v32 = vld [vmem:[#allocation2 + $0x24] sm:$0xf]
    %v33 = vld [vmem:[#allocation2 + $0x28] sm:$0xf]
    %v34 = vld [vmem:[#allocation2 + $0x2c] sm:$0xf]
    %v35 = vld [vmem:[#allocation2 + $0x30] sm:$0xf]
    %v36 = vld [vmem:[#allocation2 + $0x34] sm:$0xf]
    %v37 = vld [vmem:[#allocation2 + $0x38] sm:$0xf]
    %v38 = vld [vmem:[#allocation2 + $0x3c] sm:$0xf]
    %v39 = vld [vmem:[#allocation2 + $0x40] sm:$0xf]
    %v40 = vld [vmem:[#allocation2 + $0x44] sm:$0xf]
    %v41 = vld [vmem:[#allocation2 + $0x48] sm:$0xf]
    %v42 = vld [vmem:[#allocation2 + $0x4c] sm:$0xf]
    %v43 = vld [vmem:[#allocation2 + $0x50] sm:$0xf]
    %v44 = vld [vmem:[#allocation2 + $0x54] sm:$0xf]
    %v45 = vld [vmem:[#allocation2 + $0x58] sm:$0xf]
    %v46 = vld [vmem:[#allocation2 + $0x5c] sm:$0xf]
    %v47 = vld [vmem:[#allocation2 + $0x60] sm:$0xf]
    %v48 = vld [vmem:[#allocation2 + $0x64] sm:$0xf]
    %v49 = vld [vmem:[#allocation2 + $0x68] sm:$0xf]
    %v50 = vld [vmem:[#allocation2 + $0x6c] sm:$0xf]
    %v51 = vld [vmem:[#allocation2 + $0x70] sm:$0xf]
    %v52 = vld [vmem:[#allocation2 + $0x74] sm:$0xf]
    %v53 = vld [vmem:[#allocation2 + $0x78] sm:$0xf]
    %v54 = vld [vmem:[#allocation2 + $0x7c] sm:$0xf]
    %v55 = vcombine.low %v23, %v25
    %v57 = vunpack.c.l.s4 1983009808
    %v58 = vunpack.c.0.s8 %v57
    %v59 = vlaneseq
    %v60 = vshrl.u32 %v59, 7
    %v61 = vsub.s32 %v58, %v60
    %v62 = vrot.slane %v55, %v61
    %v63 = vcombine.low %v24, %v26
    %v65 = vunpack.c.l.s4 1983009808
    %v66 = vunpack.c.0.s8 %v65
    %v67 = vlaneseq
    %v68 = vshrl.u32 %v67, 7
    %v69 = vsub.s32 %v66, %v68
    %v70 = vrot.slane %v63, %v69
    %v71 = vcombine.low %v62, %v70
    %v72 = vcombine.high %v62, %v70
    %v74 = vunpack.c.l.s4 1934713408
    %v75 = vunpack.c.0.s8 %v74
    %v76 = vlaneseq
    %v77 = vshrl.u32 %v76, 7
    %v78 = vsub.s32 %v75, %v77
    %v79 = vrot.slane %v71, %v78
    %v81 = vunpack.c.l.s4 1934713408
    %v82 = vunpack.c.0.s8 %v81
    %v83 = vlaneseq
    %v84 = vshrl.u32 %v83, 7
    %v85 = vsub.s32 %v82, %v84
    %v86 = vrot.slane %v72, %v85
    %v87 = vcombine.high %v79, 0.0
    %v88 = vcombine.high %v86, 0.0
    %v89 = vcombine.low %v27, %v29
    %v91 = vunpack.c.l.s4 1983009808
    %v92 = vunpack.c.0.s8 %v91
    %v93 = vlaneseq
    %v94 = vshrl.u32 %v93, 7
    %v95 = vsub.s32 %v92, %v94
    %v96 = vrot.slane %v89, %v95
    %v97 = vcombine.low %v28, %v30
    %v99 = vunpack.c.l.s4 1983009808
    %v100 = vunpack.c.0.s8 %v99
    %v101 = vlaneseq
    %v102 = vshrl.u32 %v101, 7
    %v103 = vsub.s32 %v100, %v102
    %v104 = vrot.slane %v97, %v103
    %v105 = vcombine.low %v96, %v104
    %v106 = vcombine.high %v96, %v104
    %v108 = vunpack.c.l.s4 1934713408
    %v109 = vunpack.c.0.s8 %v108
    %v110 = vlaneseq
    %v111 = vshrl.u32 %v110, 7
    %v112 = vsub.s32 %v109, %v111
    %v113 = vrot.slane %v105, %v112
    %v115 = vunpack.c.l.s4 1934713408
    %v116 = vunpack.c.0.s8 %v115
    %v117 = vlaneseq
    %v118 = vshrl.u32 %v117, 7
    %v119 = vsub.s32 %v116, %v118
    %v120 = vrot.slane %v106, %v119
    %v121 = vcombine.high %v113, 0.0
    %v122 = vcombine.high %v120, 0.0
    %v123 = vcombine.low %v31, %v33
    %v125 = vunpack.c.l.s4 1983009808
    %v126 = vunpack.c.0.s8 %v125
    %v127 = vlaneseq
    %v128 = vshrl.u32 %v127, 7
    %v129 = vsub.s32 %v126, %v128
    %v130 = vrot.slane %v123, %v129
    %v131 = vcombine.low %v32, %v34
    %v133 = vunpack.c.l.s4 1983009808
    %v134 = vunpack.c.0.s8 %v133
    %v135 = vlaneseq
    %v136 = vshrl.u32 %v135, 7
    %v137 = vsub.s32 %v134, %v136
    %v138 = vrot.slane %v131, %v137
    %v139 = vcombine.low %v130, %v138
    %v140 = vcombine.high %v130, %v138
    %v142 = vunpack.c.l.s4 1934713408
    %v143 = vunpack.c.0.s8 %v142
    %v144 = vlaneseq
    %v145 = vshrl.u32 %v144, 7
    %v146 = vsub.s32 %v143, %v145
    %v147 = vrot.slane %v139, %v146
    %v149 = vunpack.c.l.s4 1934713408
    %v150 = vunpack.c.0.s8 %v149
    %v151 = vlaneseq
    %v152 = vshrl.u32 %v151, 7
    %v153 = vsub.s32 %v150, %v152
    %v154 = vrot.slane %v140, %v153
    %v155 = vcombine.high %v147, 0.0
    %v156 = vcombine.high %v154, 0.0
    %v157 = vcombine.low %v35, %v37
    %v159 = vunpack.c.l.s4 1983009808
    %v160 = vunpack.c.0.s8 %v159
    %v161 = vlaneseq
    %v162 = vshrl.u32 %v161, 7
    %v163 = vsub.s32 %v160, %v162
    %v164 = vrot.slane %v157, %v163
    %v165 = vcombine.low %v36, %v38
    %v167 = vunpack.c.l.s4 1983009808
    %v168 = vunpack.c.0.s8 %v167
    %v169 = vlaneseq
    %v170 = vshrl.u32 %v169, 7
    %v171 = vsub.s32 %v168, %v170
    %v172 = vrot.slane %v165, %v171
    %v173 = vcombine.low %v164, %v172
    %v174 = vcombine.high %v164, %v172
    %v176 = vunpack.c.l.s4 1934713408
    %v177 = vunpack.c.0.s8 %v176
    %v178 = vlaneseq
    %v179 = vshrl.u32 %v178, 7
    %v180 = vsub.s32 %v177, %v179
    %v181 = vrot.slane %v173, %v180
    %v183 = vunpack.c.l.s4 1934713408
    %v184 = vunpack.c.0.s8 %v183
    %v185 = vlaneseq
    %v186 = vshrl.u32 %v185, 7
    %v187 = vsub.s32 %v184, %v186
    %v188 = vrot.slane %v174, %v187
    %v189 = vcombine.high %v181, 0.0
    %v190 = vcombine.high %v188, 0.0
    %v191 = vcombine.low %v39, %v41
    %v193 = vunpack.c.l.s4 1983009808
    %v194 = vunpack.c.0.s8 %v193
    %v195 = vlaneseq
    %v196 = vshrl.u32 %v195, 7
    %v197 = vsub.s32 %v194, %v196
    %v198 = vrot.slane %v191, %v197
    %v199 = vcombine.low %v40, %v42
    %v201 = vunpack.c.l.s4 1983009808
    %v202 = vunpack.c.0.s8 %v201
    %v203 = vlaneseq
    %v204 = vshrl.u32 %v203, 7
    %v205 = vsub.s32 %v202, %v204
    %v206 = vrot.slane %v199, %v205
    %v207 = vcombine.low %v198, %v206
    %v208 = vcombine.high %v198, %v206
    %v210 = vunpack.c.l.s4 1934713408
    %v211 = vunpack.c.0.s8 %v210
    %v212 = vlaneseq
    %v213 = vshrl.u32 %v212, 7
    %v214 = vsub.s32 %v211, %v213
    %v215 = vrot.slane %v207, %v214
    %v217 = vunpack.c.l.s4 1934713408
    %v218 = vunpack.c.0.s8 %v217
    %v219 = vlaneseq
    %v220 = vshrl.u32 %v219, 7
    %v221 = vsub.s32 %v218, %v220
    %v222 = vrot.slane %v208, %v221
    %v223 = vcombine.high %v215, 0.0
    %v224 = vcombine.high %v222, 0.0
    %v225 = vcombine.low %v43, %v45
    %v227 = vunpack.c.l.s4 1983009808
    %v228 = vunpack.c.0.s8 %v227
    %v229 = vlaneseq
    %v230 = vshrl.u32 %v229, 7
    %v231 = vsub.s32 %v228, %v230
    %v232 = vrot.slane %v225, %v231
    %v233 = vcombine.low %v44, %v46
    %v235 = vunpack.c.l.s4 1983009808
    %v236 = vunpack.c.0.s8 %v235
    %v237 = vlaneseq
    %v238 = vshrl.u32 %v237, 7
    %v239 = vsub.s32 %v236, %v238
    %v240 = vrot.slane %v233, %v239
    %v241 = vcombine.low %v232, %v240
    %v242 = vcombine.high %v232, %v240
    %v244 = vunpack.c.l.s4 1934713408
    %v245 = vunpack.c.0.s8 %v244
    %v246 = vlaneseq
    %v247 = vshrl.u32 %v246, 7
    %v248 = vsub.s32 %v245, %v247
    %v249 = vrot.slane %v241, %v248
    %v251 = vunpack.c.l.s4 1934713408
    %v252 = vunpack.c.0.s8 %v251
    %v253 = vlaneseq
    %v254 = vshrl.u32 %v253, 7
    %v255 = vsub.s32 %v252, %v254
    %v256 = vrot.slane %v242, %v255
    %v257 = vcombine.high %v249, 0.0
    %v258 = vcombine.high %v256, 0.0
    %v259 = vcombine.low %v47, %v49
    %v261 = vunpack.c.l.s4 1983009808
    %v262 = vunpack.c.0.s8 %v261
    %v263 = vlaneseq
    %v264 = vshrl.u32 %v263, 7
    %v265 = vsub.s32 %v262, %v264
    %v266 = vrot.slane %v259, %v265
    %v267 = vcombine.low %v48, %v50
    %v269 = vunpack.c.l.s4 1983009808
    %v270 = vunpack.c.0.s8 %v269
    %v271 = vlaneseq
    %v272 = vshrl.u32 %v271, 7
    %v273 = vsub.s32 %v270, %v272
    %v274 = vrot.slane %v267, %v273
    %v275 = vcombine.low %v266, %v274
    %v276 = vcombine.high %v266, %v274
    %v278 = vunpack.c.l.s4 1934713408
    %v279 = vunpack.c.0.s8 %v278
    %v280 = vlaneseq
    %v281 = vshrl.u32 %v280, 7
    %v282 = vsub.s32 %v279, %v281
    %v283 = vrot.slane %v275, %v282
    %v285 = vunpack.c.l.s4 1934713408
    %v286 = vunpack.c.0.s8 %v285
    %v287 = vlaneseq
    %v288 = vshrl.u32 %v287, 7
    %v289 = vsub.s32 %v286, %v288
    %v290 = vrot.slane %v276, %v289
    %v291 = vcombine.high %v283, 0.0
    %v292 = vcombine.high %v290, 0.0
    %v293 = vcombine.low %v51, %v53
    %v295 = vunpack.c.l.s4 1983009808
    %v296 = vunpack.c.0.s8 %v295
    %v297 = vlaneseq
    %v298 = vshrl.u32 %v297, 7
    %v299 = vsub.s32 %v296, %v298
    %v300 = vrot.slane %v293, %v299
    %v301 = vcombine.low %v52, %v54
    %v303 = vunpack.c.l.s4 1983009808
    %v304 = vunpack.c.0.s8 %v303
    %v305 = vlaneseq
    %v306 = vshrl.u32 %v305, 7
    %v307 = vsub.s32 %v304, %v306
    %v308 = vrot.slane %v301, %v307
    %v309 = vcombine.low %v300, %v308
    %v310 = vcombine.high %v300, %v308
    %v312 = vunpack.c.l.s4 1934713408
    %v313 = vunpack.c.0.s8 %v312
    %v314 = vlaneseq
    %v315 = vshrl.u32 %v314, 7
    %v316 = vsub.s32 %v313, %v315
    %v317 = vrot.slane %v309, %v316
    %v319 = vunpack.c.l.s4 1934713408
    %v320 = vunpack.c.0.s8 %v319
    %v321 = vlaneseq
    %v322 = vshrl.u32 %v321, 7
    %v323 = vsub.s32 %v320, %v322
    %v324 = vrot.slane %v310, %v323
    %v325 = vcombine.high %v317, 0.0
    %v326 = vcombine.high %v324, 0.0
    %327 = vst [vmem:[#allocation5] sm:$0xf] %v79
    %328 = vst [vmem:[#allocation5 + $0x4] sm:$0xf] %v87
    %329 = vst [vmem:[#allocation5 + $0x8] sm:$0xf] %v86
    %330 = vst [vmem:[#allocation5 + $0xc] sm:$0xf] %v88
    %331 = vst [vmem:[#allocation5 + $0x10] sm:$0xf] %v113
    %332 = vst [vmem:[#allocation5 + $0x14] sm:$0xf] %v121
    %333 = vst [vmem:[#allocation5 + $0x18] sm:$0xf] %v120
    %334 = vst [vmem:[#allocation5 + $0x1c] sm:$0xf] %v122
    %335 = vst [vmem:[#allocation5 + $0x20] sm:$0xf] %v147
    %336 = vst [vmem:[#allocation5 + $0x24] sm:$0xf] %v155
    %337 = vst [vmem:[#allocation5 + $0x28] sm:$0xf] %v154
    %338 = vst [vmem:[#allocation5 + $0x2c] sm:$0xf] %v156
    %339 = vst [vmem:[#allocation5 + $0x30] sm:$0xf] %v181
    %340 = vst [vmem:[#allocation5 + $0x34] sm:$0xf] %v189
    %341 = vst [vmem:[#allocation5 + $0x38] sm:$0xf] %v188
    %342 = vst [vmem:[#allocation5 + $0x3c] sm:$0xf] %v190
    %343 = vst [vmem:[#allocation5 + $0x40] sm:$0xf] %v215
    %344 = vst [vmem:[#allocation5 + $0x44] sm:$0xf] %v223
    %345 = vst [vmem:[#allocation5 + $0x48] sm:$0xf] %v222
    %346 = vst [vmem:[#allocation5 + $0x4c] sm:$0xf] %v224
    %347 = vst [vmem:[#allocation5 + $0x50] sm:$0xf] %v249
    %348 = vst [vmem:[#allocation5 + $0x54] sm:$0xf] %v257
    %349 = vst [vmem:[#allocation5 + $0x58] sm:$0xf] %v256
    %350 = vst [vmem:[#allocation5 + $0x5c] sm:$0xf] %v258
    %351 = vst [vmem:[#allocation5 + $0x60] sm:$0xf] %v283
    %352 = vst [vmem:[#allocation5 + $0x64] sm:$0xf] %v291
    %353 = vst [vmem:[#allocation5 + $0x68] sm:$0xf] %v290
    %354 = vst [vmem:[#allocation5 + $0x6c] sm:$0xf] %v292
    %355 = vst [vmem:[#allocation5 + $0x70] sm:$0xf] %v317
    %356 = vst [vmem:[#allocation5 + $0x74] sm:$0xf] %v325
    %357 = vst [vmem:[#allocation5 + $0x78] sm:$0xf] %v324
    %358 = vst [vmem:[#allocation5 + $0x7c] sm:$0xf] %v326
    // Predicated region
    $region10: #{tpu_custom_call.1} parent=1 // pred_check
      _
    $region11: #{tpu_custom_call.1} parent=1 // pred_check_branch
      %360 = sbr.rel (0) target = $region13
    $region12: #{tpu_custom_call.1} parent=1 // pred_region
      %s362 = ssub.s32 2048, 2048
      %363 = vsyncadd [#allocation4], %s362
      %s364 = sshll.u32 [#allocation5], 4
      %s365 = int_to_ptr.vmem [resolvable:$true] %s364
      %370 = dma.vmem_to_hbm [thread:$0]  %s365, 2048, %s1, [#allocation4], 64, 64, 4
    $region13: #{tpu_custom_call.1} parent=1 // pred_fallthru
      _
    // Predicated region
    $region14: #{tpu_custom_call.1} parent=1 // pred_check
      _
    $region15: #{tpu_custom_call.1} parent=1 // pred_check_branch
      %372 = sbr.rel (0) target = $region17
    $region16: #{tpu_custom_call.1} parent=1 // pred_region
      %373 = dma.done [#allocation4], 2048
    $region17: #{tpu_custom_call.1} parent=1 // pred_fallthru
      _
    %374 = vsyncpa [#allocation3], 1
    %375 = vsyncpa [#allocation4], 1

</llo_original>
